<compile_context>
chip_gen: v7x
topology: tpu7x:2x2x1
jax: 0.10.0
libtpu: 0.0.40
codegen_flags: <defaults>
</compile_context>

<pallas_src>
import functools

import jax
import jax.numpy as jnp
from jax.experimental import pallas as pl
from jax.experimental.pallas import tpu as pltpu


def _round_up(x, m):
    return (x + m - 1) // m * m


# ----------------------------------------------------------------------------
# kernel helpers (operate on values, statics are Python ints/floats -> literals)
# ----------------------------------------------------------------------------
def _gather_logits(idx_col, table_ref):
    """Embedding row-gather as one-hot @ table on the MXU.

    idx_col: (TBT, 1) int32, table_ref: (Vp, Vp) f32 -> ((TBT, Vp) f32, lane iota).
    precision=HIGHEST guarantees the f32 table values are reproduced exactly.
    """
    TBT = idx_col.shape[0]
    Vp = table_ref.shape[0]
    lane = jax.lax.broadcasted_iota(jnp.int32, (TBT, Vp), dimension=1)
    one_hot = (lane == idx_col).astype(jnp.float32)
    logits = jnp.dot(one_hot, table_ref[...],
                     preferred_element_type=jnp.float32,
                     precision=jax.lax.Precision.HIGHEST)
    return logits, lane


def _ce_partial_sum(logits, lane, tgt_col, *, V, BT, TBT):
    """Sum of per-row cross-entropy for this block; padded vocab lanes and
    padded rows contribute exactly 0."""
    Vp = logits.shape[1]
    # additive vocab mask row: 0.0 for real lanes, -1e30 for padding lanes.
    vmask = jnp.where(
        jax.lax.broadcasted_iota(jnp.int32, (1, Vp), dimension=1) < V,
        0.0, -1e30)
    masked = logits + vmask
    m = jnp.max(masked, axis=-1, keepdims=True)                        # (TBT, 1)
    lse = m + jnp.log(jnp.sum(jnp.exp(masked - m), axis=-1, keepdims=True))
    # target-logit gather without materializing a second one-hot matmul:
    tgt_logit = jnp.sum(jnp.where(lane == tgt_col, logits, 0.0),
                        axis=-1, keepdims=True)                        # (TBT, 1)
    row = (pl.program_id(0) * TBT
           + jax.lax.broadcasted_iota(jnp.int32, (TBT, 1), dimension=0))
    per_row = jnp.where(row < BT, lse - tgt_logit, 0.0)
    return jnp.sum(per_row)                                            # scalar


# ----------------------------------------------------------------------------
# kernel bodies
# ----------------------------------------------------------------------------
def _logits_kernel(idx_ref, table_ref, logits_ref):
    logits, _ = _gather_logits(idx_ref[...], table_ref)
    logits_ref[...] = logits


def _logits_loss_kernel(tok_ref, table_ref, logits_ref, loss_ref,
                        *, V, BT, TBT):
    tok = tok_ref[...]                                   # (TBT, 2) int32
    logits, lane = _gather_logits(tok[:, 0:1], table_ref)
    logits_ref[...] = logits
    partial = _ce_partial_sum(logits, lane, tok[:, 1:2], V=V, BT=BT, TBT=TBT)
    loss_ref[...] = jnp.broadcast_to(partial, loss_ref.shape)


def _loss_only_kernel(tok_ref, table_ref, loss_ref, *, V, BT, TBT):
    tok = tok_ref[...]
    logits, lane = _gather_logits(tok[:, 0:1], table_ref)
    partial = _ce_partial_sum(logits, lane, tok[:, 1:2], V=V, BT=BT, TBT=TBT)
    loss_ref[...] = jnp.broadcast_to(partial, loss_ref.shape)


# ----------------------------------------------------------------------------
# wrapper
# ----------------------------------------------------------------------------
def bigram_forward(idx, table, targets=None, *, return_logits=True,
                   block_rows=2048, tight=True):
    """Forward pass matching BigramLanguageModel.forward.

    idx:     (B, T) int token ids
    table:   (V, V) float32 embedding table (= nn.Embedding weight)
    targets: optional (B, T) int targets
    return_logits: if False (and targets given) skip the logits writeback and
      only return the loss (training-step fast path).
    tight: if True (default) slice outputs to the exact PyTorch shapes
      ((B,T,V) / (B*T,V)); if False return the padded (BT_pad, Vp) logits
      (padded entries are 0), skipping the post-kernel un-padding copy.
    """
    B, T = idx.shape
    V = table.shape[0]
    BT = B * T

    Vp = _round_up(V, 128)                     # lane-dense vocab axis
    # Row tile: multiple of 8 sublanes, per-buffer <= ~8 MiB, and split into
    # >= 2 blocks when possible so both v7x TensorCores get work.
    max_rows = max(8, ((8 << 20) // (Vp * 4)) // 8 * 8)
    half_rows = max(8, _round_up(-(-BT // 2), 8))
    TBT = max(8, min(block_rows, max_rows, half_rows))
    BT_pad = _round_up(BT, TBT)
    n_blk = BT_pad // TBT

    # Explicit VMEM budget (covers v5e's 16 MiB scoped default when TBT grows).
    per_logits_buf = TBT * Vp * 4
    per_tok_buf = TBT * 128 * 4                # int32 (TBT,2) lane-padded block
    vmem_est = (2 * Vp * Vp * 4                # table (double-buffered, tiny)
                + 2 * per_tok_buf              # packed idx/tgt double buffer
                + 2 * per_logits_buf           # logits double buffer
                + 2 * 8 * 128 * 4              # loss blocks
                + 8 * per_logits_buf)          # CE / one-hot intermediates
    vmem_limit = int(min(max(2 * vmem_est, 16 << 20), 60 << 20))
    cparams = pltpu.CompilerParams(dimension_semantics=("parallel",),
                                   vmem_limit_bytes=vmem_limit)

    # Pad the table; padded rows are never selected (idx < V) and padded
    # columns are masked out of CE / sliced off (or returned as exact zeros).
    # TODO(synk): pre-pad the embedding parameter once instead of per call.
    table_p = jnp.zeros((Vp, Vp), jnp.float32).at[:V, :V].set(
        table.astype(jnp.float32))

    tab_spec = pl.BlockSpec((Vp, Vp), lambda i: (0, 0))   # VMEM-resident
    logits_spec = pl.BlockSpec((TBT, Vp), lambda i: (i, 0))
    loss_spec = pl.BlockSpec((1, 8, 128), lambda i: (i, 0, 0))

    if targets is None:
        # inference path: pure gather + lane-dense store, no CE work.
        idx_flat = jnp.zeros((BT_pad, 1), jnp.int32).at[:BT, 0].set(
            idx.reshape(BT).astype(jnp.int32))
        idx_spec = pl.BlockSpec((TBT, 1), lambda i: (i, 0))
        logits_p = pl.pallas_call(
            _logits_kernel,
            out_shape=jax.ShapeDtypeStruct((BT_pad, Vp), jnp.float32),
            grid=(n_blk,),
            in_specs=[idx_spec, tab_spec],
            out_specs=logits_spec,
            compiler_params=cparams,
        )(idx_flat, table_p)
        if tight:
            return logits_p[:BT, :V].reshape(B, T, V), None
        return logits_p, None

    # pack idx + targets into one (BT_pad, 2) int32 input: one DMA per step.
    tok = jnp.zeros((BT_pad, 2), jnp.int32)
    tok = tok.at[:BT, 0].set(idx.reshape(BT).astype(jnp.int32))
    tok = tok.at[:BT, 1].set(targets.reshape(BT).astype(jnp.int32))
    tok_spec = pl.BlockSpec((TBT, 2), lambda i: (i, 0))

    if return_logits:
        kernel = functools.partial(_logits_loss_kernel, V=V, BT=BT, TBT=TBT)
        logits_p, loss_parts = pl.pallas_call(
            kernel,
            out_shape=(jax.ShapeDtypeStruct((BT_pad, Vp), jnp.float32),
                       jax.ShapeDtypeStruct((n_blk, 8, 128), jnp.float32)),
            grid=(n_blk,),
            in_specs=[tok_spec, tab_spec],
            out_specs=(logits_spec, loss_spec),
            compiler_params=cparams,
        )(tok, table_p)
        loss = jnp.sum(loss_parts[:, 0, 0]) / BT
        if tight:
            return logits_p[:BT, :V], loss
        return logits_p, loss

    # loss-only path: drop the (BT, Vp) logits writeback entirely.
    kernel = functools.partial(_loss_only_kernel, V=V, BT=BT, TBT=TBT)
    loss_parts = pl.pallas_call(
        kernel,
        out_shape=jax.ShapeDtypeStruct((n_blk, 8, 128), jnp.float32),
        grid=(n_blk,),
        in_specs=[tok_spec, tab_spec],
        out_specs=loss_spec,
        compiler_params=cparams,
    )(tok, table_p)
    return None, jnp.sum(loss_parts[:, 0, 0]) / BT


# ----------------------------------------------------------------------------
# pure-JAX reference
# ----------------------------------------------------------------------------
def _reference_forward(idx, table, targets=None):
    logits = table[idx]                        # (B, T, V)
    if targets is None:
        return logits, None
    B, T, V = logits.shape
    lf = logits.reshape(B * T, V)
    tf = targets.reshape(B * T)
    lse = jax.nn.logsumexp(lf, axis=-1)
    tgt = lf[jnp.arange(B * T), tf]
    return lf, jnp.mean(lse - tgt)


if __name__ == "__main__":
    key = jax.random.PRNGKey(0)
    k_tab, k_idx, k_tgt, k_idx2, k_tgt2 = jax.random.split(key, 5)

    vocabulary_size = 65          # typical char-level vocab (len(caracteres))
    table = jax.random.normal(k_tab, (vocabulary_size, vocabulary_size),
                              dtype=jnp.float32)   # nn.Embedding init: N(0, 1)

    # --- small config: B=2, T=8 ---------------------------------------------
    B, T = 2, 8
    idx = jax.random.randint(k_idx, (B, T), 0, vocabulary_size, dtype=jnp.int32)
    targets = jax.random.randint(k_tgt, (B, T), 0, vocabulary_size,
                                 dtype=jnp.int32)

    logits, loss = bigram_forward(idx, table, targets)
    jax.block_until_ready((logits, loss))
    logits_nt, loss_nt = bigram_forward(idx, table, None)
    jax.block_until_ready(logits_nt)
    assert loss_nt is None
    _, loss_only = bigram_forward(idx, table, targets, return_logits=False)
    jax.block_until_ready(loss_only)
    logits_pad, loss_pad = bigram_forward(idx, table, targets, tight=False)
    jax.block_until_ready((logits_pad, loss_pad))

    ref_logits, ref_loss = _reference_forward(idx, table, targets)
    assert logits.shape == (B * T, vocabulary_size)
    assert jnp.allclose(logits, ref_logits, atol=1e-5, rtol=1e-5)
    assert jnp.allclose(loss, ref_loss, atol=1e-5, rtol=1e-5)
    assert jnp.allclose(loss_only, ref_loss, atol=1e-5, rtol=1e-5)
    assert jnp.allclose(loss_pad, ref_loss, atol=1e-5, rtol=1e-5)
    assert jnp.allclose(logits_pad[:B * T, :vocabulary_size], ref_logits,
                        atol=1e-5, rtol=1e-5)
    assert jnp.allclose(logits_nt,
                        ref_logits.reshape(B, T, vocabulary_size),
                        atol=1e-5, rtol=1e-5)

    # --- multi-block config: exercises the grid + row-padding mask ----------
    B2, T2 = 4, 50                # BT=200, padded to 256 rows with TBT=64
    idx2 = jax.random.randint(k_idx2, (B2, T2), 0, vocabulary_size,
                              dtype=jnp.int32)
    tgt2 = jax.random.randint(k_tgt2, (B2, T2), 0, vocabulary_size,
                              dtype=jnp.int32)
    logits2, loss2 = bigram_forward(idx2, table, tgt2, block_rows=64)
    jax.block_until_ready((logits2, loss2))
    ref_logits2, ref_loss2 = _reference_forward(idx2, table, tgt2)
    assert logits2.shape == (B2 * T2, vocabulary_size)
    assert jnp.allclose(logits2, ref_logits2, atol=1e-5, rtol=1e-5)
    assert jnp.allclose(loss2, ref_loss2, atol=1e-5, rtol=1e-5)

    print("KERNEL_OK")
</pallas_src>

<mosaic_0001>
module attributes {stable_mosaic.version = 11 : i64} {
  func.func @_logits_loss_kernel(%arg0: i32, %arg1: memref<8x2xi32, #tpu.memory_space<vmem>>, %arg2: memref<128x128xf32, #tpu.memory_space<vmem>>, %arg3: memref<8x128xf32, #tpu.memory_space<vmem>>, %arg4: memref<1x8x128xf32, #tpu.memory_space<vmem>>) attributes {dimension_semantics = [#tpu.dimension_semantics<parallel>], iteration_bounds = array<i64: 2>, scalar_prefetch = 0 : i64, scratch_operands = 0 : i64, tpu.core_type = #tpu.core_type<tc>, window_params = [{transform_indices = @transform_0, window_bounds = array<i64: 8, 2>}, {pipeline_mode = #tpu.pipeline_mode<synchronous>, transform_indices = @transform_1, window_bounds = array<i64: 128, 128>}, {transform_indices = @transform_2, window_bounds = array<i64: 8, 128>}, {transform_indices = @transform_3, window_bounds = array<i64: 1, 8, 128>}]} {
    %c0 = arith.constant 0 : index
    %c0_0 = arith.constant 0 : index
    %0 = vector.load %arg1[%c0, %c0_0] : memref<8x2xi32, #tpu.memory_space<vmem>>, vector<8x2xi32>
    %1 = vector.extract_strided_slice %0 {offsets = [0, 0], sizes = [8, 1], strides = [1, 1]} : vector<8x2xi32> to vector<8x1xi32>
    %2 = tpu.iota {dimensions = array<i32: 1>} : vector<8x128xi32>
    %3 = vector.broadcast %1 : vector<8x1xi32> to vector<8x128xi32>
    %4 = arith.cmpi eq, %2, %3 : vector<8x128xi32>
    %5 = arith.extui %4 : vector<8x128xi1> to vector<8x128xi32>
    %6 = arith.sitofp %5 : vector<8x128xi32> to vector<8x128xf32>
    %c0_1 = arith.constant 0 : index
    %c0_2 = arith.constant 0 : index
    %7 = vector.load %arg2[%c0_1, %c0_2] : memref<128x128xf32, #tpu.memory_space<vmem>>, vector<128x128xf32>
    %cst = arith.constant dense<0.000000e+00> : vector<8x128xf32>
    %8 = tpu.matmul %6, %7, %cst {dimension_numbers = #tpu.dot_dimension_numbers<[1], [0], [0], [1], [0, 0, 1, 1], [], []>, precision = #tpu.contract_precision<fp32>} : vector<8x128xf32>, vector<128x128xf32>, vector<8x128xf32> -> vector<8x128xf32>
    %c0_3 = arith.constant 0 : index
    %c0_4 = arith.constant 0 : index
    %9 = vector.load %arg3[%c0_3, %c0_4] : memref<8x128xf32, #tpu.memory_space<vmem>>, vector<8x128xf32>
    tpu.vector_store %arg3[%c0_3, %c0_4], %8 {strides = array<i32>} : memref<8x128xf32, #tpu.memory_space<vmem>>, vector<8x128xf32>,
    %10 = vector.extract_strided_slice %0 {offsets = [0, 1], sizes = [8, 1], strides = [1, 1]} : vector<8x2xi32> to vector<8x1xi32>
    %11 = tpu.iota {dimensions = array<i32: 1>} : vector<1x128xi32>
    %c65_i32 = arith.constant 65 : i32
    %12 = vector.broadcast %c65_i32 : i32 to vector<1x128xi32>
    %13 = arith.cmpi slt, %11, %12 : vector<1x128xi32>
    %cst_5 = arith.constant 0.000000e+00 : f32
    %cst_6 = arith.constant -1.000000e+30 : f32
    %14 = vector.broadcast %cst_5 : f32 to vector<1x128xf32>
    %15 = vector.broadcast %cst_6 : f32 to vector<1x128xf32>
    %16 = arith.select %13, %14, %15 : vector<1x128xi1>, vector<1x128xf32>
    %17 = vector.broadcast %16 : vector<1x128xf32> to vector<8x128xf32>
    %18 = arith.addf %8, %17 : vector<8x128xf32>
    %cst_7 = arith.constant dense<0xFF800000> : vector<8xf32>
    %19 = vector.multi_reduction <maximumf>, %18, %cst_7 [1] : vector<8x128xf32> to vector<8xf32>
    %20 = vector.shape_cast %19 : vector<8xf32> to vector<8x1xf32>
    %21 = vector.broadcast %20 : vector<8x1xf32> to vector<8x128xf32>
    %22 = arith.subf %18, %21 : vector<8x128xf32>
    %23 = math.exp %22 : vector<8x128xf32>
    %cst_8 = arith.constant dense<0.000000e+00> : vector<8xf32>
    %24 = vector.multi_reduction <add>, %23, %cst_8 [1] : vector<8x128xf32> to vector<8xf32>
    %25 = vector.shape_cast %24 : vector<8xf32> to vector<8x1xf32>
    %26 = math.log %25 : vector<8x1xf32>
    %27 = arith.addf %20, %26 : vector<8x1xf32>
    %28 = vector.broadcast %10 : vector<8x1xi32> to vector<8x128xi32>
    %29 = arith.cmpi eq, %2, %28 : vector<8x128xi32>
    %cst_9 = arith.constant 0.000000e+00 : f32
    %30 = vector.broadcast %cst_9 : f32 to vector<8x128xf32>
    %31 = arith.select %29, %8, %30 : vector<8x128xi1>, vector<8x128xf32>
    %cst_10 = arith.constant dense<0.000000e+00> : vector<8xf32>
    %32 = vector.multi_reduction <add>, %31, %cst_10 [1] : vector<8x128xf32> to vector<8xf32>
    %33 = vector.shape_cast %32 : vector<8xf32> to vector<8x1xf32>
    %c8_i32 = arith.constant 8 : i32
    %34 = arith.muli %arg0, %c8_i32 : i32
    %35 = tpu.iota {dimensions = array<i32: 0>} : vector<8x1xi32>
    %36 = vector.broadcast %34 : i32 to vector<8x1xi32>
    %37 = arith.addi %36, %35 : vector<8x1xi32>
    %c16_i32 = arith.constant 16 : i32
    %38 = vector.broadcast %c16_i32 : i32 to vector<8x1xi32>
    %39 = arith.cmpi slt, %37, %38 : vector<8x1xi32>
    %40 = arith.subf %27, %33 : vector<8x1xf32>
    %cst_11 = arith.constant 0.000000e+00 : f32
    %41 = vector.broadcast %cst_11 : f32 to vector<8x1xf32>
    %42 = arith.select %39, %40, %41 : vector<8x1xi1>, vector<8x1xf32>
    %43 = vector.shape_cast %42 : vector<8x1xf32> to vector<1x8x1xf32>
    %cst_12 = arith.constant dense<0.000000e+00> : vector<1xf32>
    %44 = vector.multi_reduction <add>, %43, %cst_12 [1, 2] : vector<1x8x1xf32> to vector<1xf32>
    %45 = vector.shape_cast %44 : vector<1xf32> to vector<1x1x1xf32>
    %46 = vector.extract %45[0, 0, 0] : f32 from vector<1x1x1xf32>
    %47 = vector.broadcast %46 : f32 to vector<1x8x128xf32>
    %c0_13 = arith.constant 0 : index
    %c0_14 = arith.constant 0 : index
    %c0_15 = arith.constant 0 : index
    %48 = vector.load %arg4[%c0_13, %c0_14, %c0_15] : memref<1x8x128xf32, #tpu.memory_space<vmem>>, vector<1x8x128xf32>
    tpu.vector_store %arg4[%c0_13, %c0_14, %c0_15], %47 {strides = array<i32>} : memref<1x8x128xf32, #tpu.memory_space<vmem>>, vector<1x8x128xf32>,
    return
  }
  func.func @transform_0(%arg0: i32) -> (i32, i32) {
    %c0_i32 = arith.constant 0 : i32
    %c0_i32_0 = arith.constant 0 : i32
    return %arg0, %c0_i32 : i32, i32
  }
  func.func @transform_1(%arg0: i32) -> (i32, i32) {
    %c0_i32 = arith.constant 0 : i32
    %c0_i32_0 = arith.constant 0 : i32
    %c0_i32_1 = arith.constant 0 : i32
    return %c0_i32, %c0_i32_0 : i32, i32
  }
  func.func @transform_2(%arg0: i32) -> (i32, i32) {
    %c0_i32 = arith.constant 0 : i32
    %c0_i32_0 = arith.constant 0 : i32
    return %arg0, %c0_i32 : i32, i32
  }
  func.func @transform_3(%arg0: i32) -> (i32, i32, i32) {
    %c0_i32 = arith.constant 0 : i32
    %c0_i32_0 = arith.constant 0 : i32
    %c0_i32_1 = arith.constant 0 : i32
    return %arg0, %c0_i32, %c0_i32_0 : i32, i32, i32
  }
}

</mosaic_0001>

<llo_original>
// kernel: tpu_custom_call.1
$region0: #{tpu_custom_call.1}
  #allocation0 [shape = 'u32[]', space=smem, size = 0x4, offset = 0x4, fixed_abs, tag = 'smem constant byte address 0x4 - core index']
  #allocation1 [shape = 'u32[144,128]{1,0:T(1,128)}', space=vmem, size = 0x12000, scoped, tag = 'internal scratch']
  %s0 = inlined_call_operand.vmem [shape: s32[16,2], index: 0, kind: input, shape index: {}]
  %s1 = inlined_call_operand.hbm [shape: f32[128,128], index: 1, kind: input, shape index: {}]
  %s2 = inlined_call_operand.hbm [shape: f32[16,128], index: 2, kind: output, shape index: {0}]
  %s3 = inlined_call_operand.hbm [shape: f32[2,8,128], index: 3, kind: output, shape index: {1}]
  %4 = xla_tuple %s2, %s3
  %s5 = sld [smem:[#allocation0]]
  $region53: #{tpu_custom_call.1} parent=0
    _
  %s7 = ssub.s32 1, %s5
  %s8 = scalar_select 0, %s7, %s5
  $region1: #{tpu_custom_call.1} parent=0
    #allocation2 [shape = 'u8[65536]{0}', space=vmem, size = 0x10000, scoped, tag = 'input window, operand 1, single buffered']
    #allocation3 [shape = 's32[2]{0}', space=sflag, size = 0x8, scoped, tag = 'scoped memory for tpu_custom_call.1']
    #allocation4 [shape = 's32[2]{0}', space=sflag, size = 0x8, scoped, tag = 'scoped memory for tpu_custom_call.1']
    #allocation5 [shape = 'u8[8192]{0}', space=vmem, size = 0x2000, scoped, tag = 'output window, operand 0']
    #allocation6 [shape = 'u8[8192]{0}', space=vmem, size = 0x2000, scoped, tag = 'output window, operand 1']
    #allocation7 [shape = 's32[2]{0}', space=sflag, size = 0x8, scoped, tag = 'scoped memory for tpu_custom_call.1']
    %9 = vsyncpa [#allocation3], 0
    %10 = vsyncpa [#allocation4], 0
    %s11 = scalar_lea.sflag [#allocation4], 1
    %12 = vsyncpa %s11, 0
    %13 = vsyncpa [#allocation7], 0
    %s14 = scalar_lea.sflag [#allocation7], 1
    %15 = vsyncpa %s14, 0
    loop: start=0, step=1, limit=4
    $region2: #{tpu_custom_call.1} parent=1 // loop_pre_header
      _
    $region3: #{tpu_custom_call.1} parent=1 // loop_header
      %s17 = sphi 0, %s21
      %p18 = scmp.ge.s32.totalorder %s17, 4
      %s27 = sphi 0, %s29
      %s30 = sphi 0, %s27
      %s31 = sphi 0, %s30
      %s47 = sphi 0, %s31
      %s51 = sphi 0, %s51
      %s53 = sphi 0, %s51
      %s54 = sphi 0, %s53
      %s68 = sphi 0, %s54
      %s74 = sphi 0, %s76
      %s77 = sphi 0, %s74
      %s78 = sphi 0, %s77
      %s94 = sphi 0, %s78
      %s100 = sphi 0, %s102
      %s103 = sphi 0, %s100
      %s104 = sphi 0, %s103
      %s120 = sphi 0, %s104
    $region4: #{tpu_custom_call.1} parent=1 // loop_header_branch
      %20 = sbr.rel (%p18) target = $region8
    $region5: #{tpu_custom_call.1} parent=1 // loop_body
      %s22 = ssub.s32 %s17, 1
      %s23 = ssub.s32 %s17, 2
      %s24 = sadd.s32 %s17, 1
      %s25 = ssub.s32 %s17, %s24
      %p26 = scmp.eq.s32.totalorder %s25, 0
      %s28 = sadd.s32 %s27, 1
      %s29 = scalar_select %p26, %s27, %s28
      %p32 = pneg %p26
      %p33 = scmp.eq.s32.totalorder %s17, 1
      %p34 = por %p32, %p33
      %p35 = scmp.ne.s32.totalorder %s27, %s30
      %p36 = scmp.eq.s32.totalorder %s17, 0
      %p37 = por %p35, %p36
      %p38 = scmp.ne.s32.totalorder %s27, %s30
      %p39 = scmp.eq.s32.totalorder %s22, 1
      %p40 = por %p38, %p39
      %p41 = scmp.ne.s32.totalorder %s30, %s31
      %p42 = scmp.eq.s32.totalorder %s22, 0
      %p43 = por %p41, %p42
      %p44 = scmp.ne.s32.totalorder %s30, %s31
      %p45 = scmp.eq.s32.totalorder %s23, 1
      %p46 = por %p44, %p45
      %p48 = scmp.ne.s32.totalorder %s31, %s47
      %p49 = scmp.eq.s32.totalorder %s23, 0
      %p50 = por %p48, %p49
      %s52 = sadd.s32 %s51, 1
      %p55 = scmp.eq.s32.totalorder %s17, 1
      %p56 = scmp.ne.s32.totalorder %s51, %s53
      %p57 = scmp.eq.s32.totalorder %s17, 0
      %p58 = por %p56, %p57
      %p59 = scmp.ne.s32.totalorder %s51, %s53
      %p60 = scmp.eq.s32.totalorder %s22, 1
      %p61 = por %p59, %p60
      %p62 = scmp.ne.s32.totalorder %s53, %s54
      %p63 = scmp.eq.s32.totalorder %s22, 0
      %p64 = por %p62, %p63
      %p65 = scmp.ne.s32.totalorder %s53, %s54
      %p66 = scmp.eq.s32.totalorder %s23, 1
      %p67 = por %p65, %p66
      %p69 = scmp.ne.s32.totalorder %s54, %s68
      %p70 = scmp.eq.s32.totalorder %s23, 0
      %p71 = por %p69, %p70
      %s72 = ssub.s32 %s17, %s24
      %p73 = scmp.eq.s32.totalorder %s72, 0
      %s75 = sadd.s32 %s74, 1
      %s76 = scalar_select %p73, %s74, %s75
      %p79 = pneg %p73
      %p80 = scmp.eq.s32.totalorder %s17, 1
      %p81 = por %p79, %p80
      %p82 = scmp.ne.s32.totalorder %s74, %s77
      %p83 = scmp.eq.s32.totalorder %s17, 0
      %p84 = por %p82, %p83
      %p85 = scmp.ne.s32.totalorder %s74, %s77
      %p86 = scmp.eq.s32.totalorder %s22, 1
      %p87 = por %p85, %p86
      %p88 = scmp.ne.s32.totalorder %s77, %s78
      %p89 = scmp.eq.s32.totalorder %s22, 0
      %p90 = por %p88, %p89
      %p91 = scmp.ne.s32.totalorder %s77, %s78
      %p92 = scmp.eq.s32.totalorder %s23, 1
      %p93 = por %p91, %p92
      %p95 = scmp.ne.s32.totalorder %s78, %s94
      %p96 = scmp.eq.s32.totalorder %s23, 0
      %p97 = por %p95, %p96
      %s98 = ssub.s32 %s17, %s24
      %p99 = scmp.eq.s32.totalorder %s98, 0
      %s101 = sadd.s32 %s100, 1
      %s102 = scalar_select %p99, %s100, %s101
      %p105 = pneg %p99
      %p106 = scmp.eq.s32.totalorder %s17, 1
      %p107 = por %p105, %p106
      %p108 = scmp.ne.s32.totalorder %s100, %s103
      %p109 = scmp.eq.s32.totalorder %s17, 0
      %p110 = por %p108, %p109
      %p111 = scmp.ne.s32.totalorder %s100, %s103
      %p112 = scmp.eq.s32.totalorder %s22, 1
      %p113 = por %p111, %p112
      %p114 = scmp.ne.s32.totalorder %s103, %s104
      %p115 = scmp.eq.s32.totalorder %s22, 0
      %p116 = por %p114, %p115
      %p117 = scmp.ne.s32.totalorder %s103, %s104
      %p118 = scmp.eq.s32.totalorder %s23, 1
      %p119 = por %p117, %p118
      %p121 = scmp.ne.s32.totalorder %s104, %s120
      %p122 = scmp.eq.s32.totalorder %s23, 0
      %p123 = por %p121, %p122
      %p124 = scmp.le.s32.totalorder 1, %s17
      %p125 = scmp.lt.s32.totalorder %s17, 3
      %p126 = pnand %p124, %p125
      %p127 = pneg %p126
      // Predicated region
      $region9: #{tpu_custom_call.1} parent=5 // pred_check
        _
      $region10: #{tpu_custom_call.1} parent=5 // pred_check_branch
        %129 = sbr.rel (%p126) target = $region12
      $region11: #{tpu_custom_call.1} parent=5 // pred_region
        %s130 = ssub.s32 %s17, 1
        // Predicated region
        $region13: #{tpu_custom_call.1} parent=11 // pred_check
          %p131 = pneg %p64
        $region14: #{tpu_custom_call.1} parent=11 // pred_check_branch
          %133 = sbr.rel (%p131) target = $region16
        $region15: #{tpu_custom_call.1} parent=11 // pred_region
          %s135 = ssub.s32 2048, 2048
          %136 = vsyncadd [#allocation3], %s135
          %s137 = sshll.u32 [#allocation2], 4
          %s138 = int_to_ptr.vmem [resolvable:$true] %s137
          %143 = dma.hbm_to_vmem [thread:$0]  %s1, 2048, %s138, [#allocation3], 128, 128, 8
        $region16: #{tpu_custom_call.1} parent=11 // pred_fallthru
          _
      $region12: #{tpu_custom_call.1} parent=5 // pred_fallthru
        _
      %p144 = scmp.lt.s32.totalorder %s17, 2
      // Predicated region
      $region17: #{tpu_custom_call.1} parent=5 // pred_check
        %p145 = pneg %p144
      $region18: #{tpu_custom_call.1} parent=5 // pred_check_branch
        %147 = sbr.rel (%p145) target = $region20
      $region19: #{tpu_custom_call.1} parent=5 // pred_region
        // Predicated region
        $region21: #{tpu_custom_call.1} parent=19 // pred_check
          %p148 = pneg %p37
        $region22: #{tpu_custom_call.1} parent=19 // pred_check_branch
          %150 = sbr.rel (%p148) target = $region24
        $region23: #{tpu_custom_call.1} parent=19 // pred_region
          %p151 = scmp.lt.s32.totalorder %s17, 1
          %s152 = scalar_select %p151, %s17, 1
          %s153 = smul.addr %s152, 8
          %s154 = scalar_lea.vmem %s0, %s153
        $region24: #{tpu_custom_call.1} parent=19 // pred_fallthru
          _
      $region20: #{tpu_custom_call.1} parent=5 // pred_fallthru
        _
      %p155 = scmp.le.s32.totalorder 1, %s17
      %p156 = scmp.lt.s32.totalorder %s17, 3
      %p157 = pnand %p155, %p156
      %p158 = pneg %p157
      // Predicated region
      $region25: #{tpu_custom_call.1} parent=5 // pred_check
        _
      $region26: #{tpu_custom_call.1} parent=5 // pred_check_branch
        %160 = sbr.rel (%p157) target = $region28
      $region27: #{tpu_custom_call.1} parent=5 // pred_region
        %s161 = ssub.s32 %s17, 1
        // Predicated region
        $region29: #{tpu_custom_call.1} parent=27 // pred_check
          %p162 = pneg %p64
        $region30: #{tpu_custom_call.1} parent=27 // pred_check_branch
          %164 = sbr.rel (%p162) target = $region32
        $region31: #{tpu_custom_call.1} parent=27 // pred_region
          %165 = dma.done [#allocation3], 2048
        $region32: #{tpu_custom_call.1} parent=27 // pred_fallthru
          _
        %p166 = scmp.lt.s32.totalorder %s22, 1
        %s167 = scalar_select %p166, %s22, 1
        %s168 = smul.addr %s167, 8
        %s169 = scalar_lea.vmem %s0, %s168
        %p170 = pneg %p43
        %p171 = pneg %p40
        %p172 = pneg %p64
        %p173 = pneg %p61
        %p174 = pneg %p90
        %p175 = pneg %p87
        %s176 = sand.u32 %s77, 1
        %s177 = scalar_lea.sflag [#allocation4], %s176
        %s178 = sand.u32 %s77, 1
        %s179 = smul.addr %s178, 8
        %s180 = scalar_lea.vmem [#allocation5], %s179
        %p181 = pneg %p116
        %p182 = pneg %p113
        %s183 = sand.u32 %s103, 1
        %s184 = scalar_lea.sflag [#allocation7], %s183
        %s185 = sand.u32 %s103, 1
        %s186 = smul.addr %s185, 8
        %s187 = scalar_lea.vmem [#allocation6], %s186
        %p188 = scmp.lt.s32.totalorder %s22, 1
        %s189 = scalar_select %p188, %s22, 1
        %s190 = smul.addr %s189, 8
        %s191 = scalar_lea.vmem %s0, %s190
        %v192 = vld [vmem:[%s191] sm:$0xff]
        %v193 = vlaneseq
        %v194 = vand.u32 %v193, 127
        %195 = vset.pattern.permute.xlu0 0
        %196 = vperm.xlu0 %195, %v192
        %v197 = vpop.permute.xlu0 %196
        %vm198 = vcmp.eq.s32.totalorder %v194, %v197
        %v199 = vsel %vm198, 1, 0
        %v200 = vcvt.s32.f32 %v199
        %v201 = vld [vmem:[#allocation2] sm:$0xff]
        %v202 = vld [vmem:[#allocation2 + $0x8] sm:$0xff]
        %v203 = vld [vmem:[#allocation2 + $0x10] sm:$0xff]
        %v204 = vld [vmem:[#allocation2 + $0x18] sm:$0xff]
        %v205 = vld [vmem:[#allocation2 + $0x20] sm:$0xff]
        %v206 = vld [vmem:[#allocation2 + $0x28] sm:$0xff]
        %v207 = vld [vmem:[#allocation2 + $0x30] sm:$0xff]
        %v208 = vld [vmem:[#allocation2 + $0x38] sm:$0xff]
        %v209 = vld [vmem:[#allocation2 + $0x40] sm:$0xff]
        %v210 = vld [vmem:[#allocation2 + $0x48] sm:$0xff]
        %v211 = vld [vmem:[#allocation2 + $0x50] sm:$0xff]
        %v212 = vld [vmem:[#allocation2 + $0x58] sm:$0xff]
        %v213 = vld [vmem:[#allocation2 + $0x60] sm:$0xff]
        %v214 = vld [vmem:[#allocation2 + $0x68] sm:$0xff]
        %v215 = vld [vmem:[#allocation2 + $0x70] sm:$0xff]
        %v216 = vld [vmem:[#allocation2 + $0x78] sm:$0xff]
        %217 = vmatprep.subr.mxu0 0.0
        %v218 = vand.u32 %v201, 4294901760
        %219 = vmatpush1.msra.mxu0 %v218
        %220 = vmatprep.subr.mxu0 0.0
        %v221 = vand.u32 %v202, 4294901760
        %222 = vmatpush1.msra.mxu0 %v221
        %223 = vmatprep.subr.mxu0 0.0
        %v224 = vand.u32 %v203, 4294901760
        %225 = vmatpush1.msra.mxu0 %v224
        %226 = vmatprep.subr.mxu0 0.0
        %v227 = vand.u32 %v204, 4294901760
        %228 = vmatpush1.msra.mxu0 %v227
        %229 = vmatprep.subr.mxu0 0.0
        %v230 = vand.u32 %v205, 4294901760
        %231 = vmatpush1.msra.mxu0 %v230
        %232 = vmatprep.subr.mxu0 0.0
        %v233 = vand.u32 %v206, 4294901760
        %234 = vmatpush1.msra.mxu0 %v233
        %235 = vmatprep.subr.mxu0 0.0
        %v236 = vand.u32 %v207, 4294901760
        %237 = vmatpush1.msra.mxu0 %v236
        %238 = vmatprep.subr.mxu0 0.0
        %v239 = vand.u32 %v208, 4294901760
        %240 = vmatpush1.msra.mxu0 %v239
        %241 = vmatprep.subr.mxu0 0.0
        %v242 = vand.u32 %v209, 4294901760
        %243 = vmatpush1.msra.mxu0 %v242
        %244 = vmatprep.subr.mxu0 0.0
        %v245 = vand.u32 %v210, 4294901760
        %246 = vmatpush1.msra.mxu0 %v245
        %247 = vmatprep.subr.mxu0 0.0
        %v248 = vand.u32 %v211, 4294901760
        %249 = vmatpush1.msra.mxu0 %v248
        %250 = vmatprep.subr.mxu0 0.0
        %v251 = vand.u32 %v212, 4294901760
        %252 = vmatpush1.msra.mxu0 %v251
        %253 = vmatprep.subr.mxu0 0.0
        %v254 = vand.u32 %v213, 4294901760
        %255 = vmatpush1.msra.mxu0 %v254
        %256 = vmatprep.subr.mxu0 0.0
        %v257 = vand.u32 %v214, 4294901760
        %258 = vmatpush1.msra.mxu0 %v257
        %259 = vmatprep.subr.mxu0 0.0
        %v260 = vand.u32 %v215, 4294901760
        %261 = vmatpush1.msra.mxu0 %v260
        %262 = vmatprep.subr.mxu0 0.0
        %v263 = vand.u32 %v216, 4294901760
        %264 = vmatpush1.msra.mxu0 %v263
        %265 = vmatprep.subr.mxu0 0.0
        %266 = vmatpush1.msra.mxu0 0.0
        %267 = vmatprep.subr.mxu0 0.0
        %268 = vmatpush1.msra.mxu0 0.0
        %269 = vmatprep.subr.mxu0 0.0
        %270 = vmatpush1.msra.mxu0 0.0
        %271 = vmatprep.subr.mxu0 0.0
        %272 = vmatpush1.msra.mxu0 0.0
        %273 = vmatprep.subr.mxu0 0.0
        %274 = vmatpush1.msra.mxu0 0.0
        %275 = vmatprep.subr.mxu0 0.0
        %276 = vmatpush1.msra.mxu0 0.0
        %277 = vmatprep.subr.mxu0 0.0
        %278 = vmatpush1.msra.mxu0 0.0
        %279 = vmatprep.subr.mxu0 0.0
        %280 = vmatpush1.msra.mxu0 0.0
        %281 = vmatprep.subr.mxu0 0.0
        %282 = vmatpush1.msra.mxu0 0.0
        %283 = vmatprep.subr.mxu0 0.0
        %284 = vmatpush1.msra.mxu0 0.0
        %285 = vmatprep.subr.mxu0 0.0
        %286 = vmatpush1.msra.mxu0 0.0
        %287 = vmatprep.subr.mxu0 0.0
        %288 = vmatpush1.msra.mxu0 0.0
        %289 = vmatprep.subr.mxu0 0.0
        %290 = vmatpush1.msra.mxu0 0.0
        %291 = vmatprep.subr.mxu0 0.0
        %292 = vmatpush1.msra.mxu0 0.0
        %293 = vmatprep.subr.mxu0 0.0
        %294 = vmatpush1.msra.mxu0 0.0
        %295 = vmatprep.subr.mxu0 0.0
        %296 = vmatpush1.msra.mxu0 0.0
        %297 = vmatprep.mubr.f32.mxu0 0.0
        %v298 = vand.u32 %v200, 4294901760
        %v299 = vsub.f32 %v200, %v298
        %v300 = vand.u32 %v299, 4294901760
        %v301 = vsub.f32 %v299, %v300
        %v302 = vand.u32 %v301, 4294901760
        %303 = vmatmul.mubr.f32.gmra.mrb[0].mxu0 %v302
        %v304 = vpop.f32.mrb[0].mxu0
        %v305 = vadd.f32 0.0, %v304
        %v306 = vpop.f32.mrb[0].mxu0
        %307 = vdwg.mxu0
        %308 = vmatprep.subr.mxu0 0.0
        %v309 = vand.u32 %v201, 4294901760
        %v310 = vsub.f32 %v201, %v309
        %v311 = vand.u32 %v310, 4294901760
        %v312 = vsub.f32 %v310, %v311
        %v313 = vand.u32 %v312, 4294901760
        %314 = vmatpush1.msra.mxu0 %v313
        %315 = vmatprep.subr.mxu0 0.0
        %v316 = vand.u32 %v202, 4294901760
        %v317 = vsub.f32 %v202, %v316
        %v318 = vand.u32 %v317, 4294901760
        %v319 = vsub.f32 %v317, %v318
        %v320 = vand.u32 %v319, 4294901760
        %321 = vmatpush1.msra.mxu0 %v320
        %322 = vmatprep.subr.mxu0 0.0
        %v323 = vand.u32 %v203, 4294901760
        %v324 = vsub.f32 %v203, %v323
        %v325 = vand.u32 %v324, 4294901760
        %v326 = vsub.f32 %v324, %v325
        %v327 = vand.u32 %v326, 4294901760
        %328 = vmatpush1.msra.mxu0 %v327
        %329 = vmatprep.subr.mxu0 0.0
        %v330 = vand.u32 %v204, 4294901760
        %v331 = vsub.f32 %v204, %v330
        %v332 = vand.u32 %v331, 4294901760
        %v333 = vsub.f32 %v331, %v332
        %v334 = vand.u32 %v333, 4294901760
        %335 = vmatpush1.msra.mxu0 %v334
        %336 = vmatprep.subr.mxu0 0.0
        %v337 = vand.u32 %v205, 4294901760
        %v338 = vsub.f32 %v205, %v337
        %v339 = vand.u32 %v338, 4294901760
        %v340 = vsub.f32 %v338, %v339
        %v341 = vand.u32 %v340, 4294901760
        %342 = vmatpush1.msra.mxu0 %v341
        %343 = vmatprep.subr.mxu0 0.0
        %v344 = vand.u32 %v206, 4294901760
        %v345 = vsub.f32 %v206, %v344
        %v346 = vand.u32 %v345, 4294901760
        %v347 = vsub.f32 %v345, %v346
        %v348 = vand.u32 %v347, 4294901760
        %349 = vmatpush1.msra.mxu0 %v348
        %350 = vmatprep.subr.mxu0 0.0
        %v351 = vand.u32 %v207, 4294901760
        %v352 = vsub.f32 %v207, %v351
        %v353 = vand.u32 %v352, 4294901760
        %v354 = vsub.f32 %v352, %v353
        %v355 = vand.u32 %v354, 4294901760
        %356 = vmatpush1.msra.mxu0 %v355
        %357 = vmatprep.subr.mxu0 0.0
        %v358 = vand.u32 %v208, 4294901760
        %v359 = vsub.f32 %v208, %v358
        %v360 = vand.u32 %v359, 4294901760
        %v361 = vsub.f32 %v359, %v360
        %v362 = vand.u32 %v361, 4294901760
        %363 = vmatpush1.msra.mxu0 %v362
        %364 = vmatprep.subr.mxu0 0.0
        %v365 = vand.u32 %v209, 4294901760
        %v366 = vsub.f32 %v209, %v365
        %v367 = vand.u32 %v366, 4294901760
        %v368 = vsub.f32 %v366, %v367
        %v369 = vand.u32 %v368, 4294901760
        %370 = vmatpush1.msra.mxu0 %v369
        %371 = vmatprep.subr.mxu0 0.0
        %v372 = vand.u32 %v210, 4294901760
        %v373 = vsub.f32 %v210, %v372
        %v374 = vand.u32 %v373, 4294901760
        %v375 = vsub.f32 %v373, %v374
        %v376 = vand.u32 %v375, 4294901760
        %377 = vmatpush1.msra.mxu0 %v376
        %378 = vmatprep.subr.mxu0 0.0
        %v379 = vand.u32 %v211, 4294901760
        %v380 = vsub.f32 %v211, %v379
        %v381 = vand.u32 %v380, 4294901760
        %v382 = vsub.f32 %v380, %v381
        %v383 = vand.u32 %v382, 4294901760
        %384 = vmatpush1.msra.mxu0 %v383
        %385 = vmatprep.subr.mxu0 0.0
        %v386 = vand.u32 %v212, 4294901760
        %v387 = vsub.f32 %v212, %v386
        %v388 = vand.u32 %v387, 4294901760
        %v389 = vsub.f32 %v387, %v388
        %v390 = vand.u32 %v389, 4294901760
        %391 = vmatpush1.msra.mxu0 %v390
        %392 = vmatprep.subr.mxu0 0.0
        %v393 = vand.u32 %v213, 4294901760
        %v394 = vsub.f32 %v213, %v393
        %v395 = vand.u32 %v394, 4294901760
        %v396 = vsub.f32 %v394, %v395
        %v397 = vand.u32 %v396, 4294901760
        %398 = vmatpush1.msra.mxu0 %v397
        %399 = vmatprep.subr.mxu0 0.0
        %v400 = vand.u32 %v214, 4294901760
        %v401 = vsub.f32 %v214, %v400
        %v402 = vand.u32 %v401, 4294901760
        %v403 = vsub.f32 %v401, %v402
        %v404 = vand.u32 %v403, 4294901760
        %405 = vmatpush1.msra.mxu0 %v404
        %406 = vmatprep.subr.mxu0 0.0
        %v407 = vand.u32 %v215, 4294901760
        %v408 = vsub.f32 %v215, %v407
        %v409 = vand.u32 %v408, 4294901760
        %v410 = vsub.f32 %v408, %v409
        %v411 = vand.u32 %v410, 4294901760
        %412 = vmatpush1.msra.mxu0 %v411
        %413 = vmatprep.subr.mxu0 0.0
        %v414 = vand.u32 %v216, 4294901760
        %v415 = vsub.f32 %v216, %v414
        %v416 = vand.u32 %v415, 4294901760
        %v417 = vsub.f32 %v415, %v416
        %v418 = vand.u32 %v417, 4294901760
        %419 = vmatpush1.msra.mxu0 %v418
        %420 = vmatprep.subr.mxu0 0.0
        %421 = vmatpush1.msra.mxu0 0.0
        %422 = vmatprep.subr.mxu0 0.0
        %423 = vmatpush1.msra.mxu0 0.0
        %424 = vmatprep.subr.mxu0 0.0
        %425 = vmatpush1.msra.mxu0 0.0
        %426 = vmatprep.subr.mxu0 0.0
        %427 = vmatpush1.msra.mxu0 0.0
        %428 = vmatprep.subr.mxu0 0.0
        %429 = vmatpush1.msra.mxu0 0.0
        %430 = vmatprep.subr.mxu0 0.0
        %431 = vmatpush1.msra.mxu0 0.0
        %432 = vmatprep.subr.mxu0 0.0
        %433 = vmatpush1.msra.mxu0 0.0
        %434 = vmatprep.subr.mxu0 0.0
        %435 = vmatpush1.msra.mxu0 0.0
        %436 = vmatprep.subr.mxu0 0.0
        %437 = vmatpush1.msra.mxu0 0.0
        %438 = vmatprep.subr.mxu0 0.0
        %439 = vmatpush1.msra.mxu0 0.0
        %440 = vmatprep.subr.mxu0 0.0
        %441 = vmatpush1.msra.mxu0 0.0
        %442 = vmatprep.subr.mxu0 0.0
        %443 = vmatpush1.msra.mxu0 0.0
        %444 = vmatprep.subr.mxu0 0.0
        %445 = vmatpush1.msra.mxu0 0.0
        %446 = vmatprep.subr.mxu0 0.0
        %447 = vmatpush1.msra.mxu0 0.0
        %448 = vmatprep.subr.mxu0 0.0
        %449 = vmatpush1.msra.mxu0 0.0
        %450 = vmatprep.subr.mxu0 0.0
        %451 = vmatpush1.msra.mxu0 0.0
        %452 = vmatprep.mubr.f32.mxu0 0.0
        %v453 = vand.u32 %v200, 4294901760
        %454 = vmatmul.mubr.f32.gmra.mrb[0].mxu0 %v453
        %v455 = vpop.f32.mrb[0].mxu0
        %v456 = vadd.f32 %v305, %v455
        %v457 = vpop.f32.mrb[0].mxu0
        %458 = vdwg.mxu0
        %459 = vmatprep.subr.mxu0 0.0
        %v460 = vand.u32 %v201, 4294901760
        %v461 = vsub.f32 %v201, %v460
        %462 = vmatpush1.msra.mxu0 %v461
        %463 = vmatprep.subr.mxu0 0.0
        %v464 = vand.u32 %v202, 4294901760
        %v465 = vsub.f32 %v202, %v464
        %466 = vmatpush1.msra.mxu0 %v465
        %467 = vmatprep.subr.mxu0 0.0
        %v468 = vand.u32 %v203, 4294901760
        %v469 = vsub.f32 %v203, %v468
        %470 = vmatpush1.msra.mxu0 %v469
        %471 = vmatprep.subr.mxu0 0.0
        %v472 = vand.u32 %v204, 4294901760
        %v473 = vsub.f32 %v204, %v472
        %474 = vmatpush1.msra.mxu0 %v473
        %475 = vmatprep.subr.mxu0 0.0
        %v476 = vand.u32 %v205, 4294901760
        %v477 = vsub.f32 %v205, %v476
        %478 = vmatpush1.msra.mxu0 %v477
        %479 = vmatprep.subr.mxu0 0.0
        %v480 = vand.u32 %v206, 4294901760
        %v481 = vsub.f32 %v206, %v480
        %482 = vmatpush1.msra.mxu0 %v481
        %483 = vmatprep.subr.mxu0 0.0
        %v484 = vand.u32 %v207, 4294901760
        %v485 = vsub.f32 %v207, %v484
        %486 = vmatpush1.msra.mxu0 %v485
        %487 = vmatprep.subr.mxu0 0.0
        %v488 = vand.u32 %v208, 4294901760
        %v489 = vsub.f32 %v208, %v488
        %490 = vmatpush1.msra.mxu0 %v489
        %491 = vmatprep.subr.mxu0 0.0
        %v492 = vand.u32 %v209, 4294901760
        %v493 = vsub.f32 %v209, %v492
        %494 = vmatpush1.msra.mxu0 %v493
        %495 = vmatprep.subr.mxu0 0.0
        %v496 = vand.u32 %v210, 4294901760
        %v497 = vsub.f32 %v210, %v496
        %498 = vmatpush1.msra.mxu0 %v497
        %499 = vmatprep.subr.mxu0 0.0
        %v500 = vand.u32 %v211, 4294901760
        %v501 = vsub.f32 %v211, %v500
        %502 = vmatpush1.msra.mxu0 %v501
        %503 = vmatprep.subr.mxu0 0.0
        %v504 = vand.u32 %v212, 4294901760
        %v505 = vsub.f32 %v212, %v504
        %506 = vmatpush1.msra.mxu0 %v505
        %507 = vmatprep.subr.mxu0 0.0
        %v508 = vand.u32 %v213, 4294901760
        %v509 = vsub.f32 %v213, %v508
        %510 = vmatpush1.msra.mxu0 %v509
        %511 = vmatprep.subr.mxu0 0.0
        %v512 = vand.u32 %v214, 4294901760
        %v513 = vsub.f32 %v214, %v512
        %514 = vmatpush1.msra.mxu0 %v513
        %515 = vmatprep.subr.mxu0 0.0
        %v516 = vand.u32 %v215, 4294901760
        %v517 = vsub.f32 %v215, %v516
        %518 = vmatpush1.msra.mxu0 %v517
        %519 = vmatprep.subr.mxu0 0.0
        %v520 = vand.u32 %v216, 4294901760
        %v521 = vsub.f32 %v216, %v520
        %522 = vmatpush1.msra.mxu0 %v521
        %523 = vmatprep.subr.mxu0 0.0
        %524 = vmatpush1.msra.mxu0 0.0
        %525 = vmatprep.subr.mxu0 0.0
        %526 = vmatpush1.msra.mxu0 0.0
        %527 = vmatprep.subr.mxu0 0.0
        %528 = vmatpush1.msra.mxu0 0.0
        %529 = vmatprep.subr.mxu0 0.0
        %530 = vmatpush1.msra.mxu0 0.0
        %531 = vmatprep.subr.mxu0 0.0
        %532 = vmatpush1.msra.mxu0 0.0
        %533 = vmatprep.subr.mxu0 0.0
        %534 = vmatpush1.msra.mxu0 0.0
        %535 = vmatprep.subr.mxu0 0.0
        %536 = vmatpush1.msra.mxu0 0.0
        %537 = vmatprep.subr.mxu0 0.0
        %538 = vmatpush1.msra.mxu0 0.0
        %539 = vmatprep.subr.mxu0 0.0
        %540 = vmatpush1.msra.mxu0 0.0
        %541 = vmatprep.subr.mxu0 0.0
        %542 = vmatpush1.msra.mxu0 0.0
        %543 = vmatprep.subr.mxu0 0.0
        %544 = vmatpush1.msra.mxu0 0.0
        %545 = vmatprep.subr.mxu0 0.0
        %546 = vmatpush1.msra.mxu0 0.0
        %547 = vmatprep.subr.mxu0 0.0
        %548 = vmatpush1.msra.mxu0 0.0
        %549 = vmatprep.subr.mxu0 0.0
        %550 = vmatpush1.msra.mxu0 0.0
        %551 = vmatprep.subr.mxu0 0.0
        %552 = vmatpush1.msra.mxu0 0.0
        %553 = vmatprep.subr.mxu0 0.0
        %554 = vmatpush1.msra.mxu0 0.0
        %555 = vmatprep.mubr.f32.mxu0 0.0
        %v556 = vand.u32 %v200, 4294901760
        %v557 = vsub.f32 %v200, %v556
        %558 = vmatmul.mubr.f32.gmra.mrb[0].mxu0 %v557
        %v559 = vpop.f32.mrb[0].mxu0
        %v560 = vadd.f32 %v456, %v559
        %v561 = vpop.f32.mrb[0].mxu0
        %562 = vdwg.mxu0
        %563 = vmatprep.subr.mxu0 0.0
        %v564 = vand.u32 %v201, 4294901760
        %565 = vmatpush1.msra.mxu0 %v564
        %566 = vmatprep.subr.mxu0 0.0
        %v567 = vand.u32 %v202, 4294901760
        %568 = vmatpush1.msra.mxu0 %v567
        %569 = vmatprep.subr.mxu0 0.0
        %v570 = vand.u32 %v203, 4294901760
        %571 = vmatpush1.msra.mxu0 %v570
        %572 = vmatprep.subr.mxu0 0.0
        %v573 = vand.u32 %v204, 4294901760
        %574 = vmatpush1.msra.mxu0 %v573
        %575 = vmatprep.subr.mxu0 0.0
        %v576 = vand.u32 %v205, 4294901760
        %577 = vmatpush1.msra.mxu0 %v576
        %578 = vmatprep.subr.mxu0 0.0
        %v579 = vand.u32 %v206, 4294901760
        %580 = vmatpush1.msra.mxu0 %v579
        %581 = vmatprep.subr.mxu0 0.0
        %v582 = vand.u32 %v207, 4294901760
        %583 = vmatpush1.msra.mxu0 %v582
        %584 = vmatprep.subr.mxu0 0.0
        %v585 = vand.u32 %v208, 4294901760
        %586 = vmatpush1.msra.mxu0 %v585
        %587 = vmatprep.subr.mxu0 0.0
        %v588 = vand.u32 %v209, 4294901760
        %589 = vmatpush1.msra.mxu0 %v588
        %590 = vmatprep.subr.mxu0 0.0
        %v591 = vand.u32 %v210, 4294901760
        %592 = vmatpush1.msra.mxu0 %v591
        %593 = vmatprep.subr.mxu0 0.0
        %v594 = vand.u32 %v211, 4294901760
        %595 = vmatpush1.msra.mxu0 %v594
        %596 = vmatprep.subr.mxu0 0.0
        %v597 = vand.u32 %v212, 4294901760
        %598 = vmatpush1.msra.mxu0 %v597
        %599 = vmatprep.subr.mxu0 0.0
        %v600 = vand.u32 %v213, 4294901760
        %601 = vmatpush1.msra.mxu0 %v600
        %602 = vmatprep.subr.mxu0 0.0
        %v603 = vand.u32 %v214, 4294901760
        %604 = vmatpush1.msra.mxu0 %v603
        %605 = vmatprep.subr.mxu0 0.0
        %v606 = vand.u32 %v215, 4294901760
        %607 = vmatpush1.msra.mxu0 %v606
        %608 = vmatprep.subr.mxu0 0.0
        %v609 = vand.u32 %v216, 4294901760
        %610 = vmatpush1.msra.mxu0 %v609
        %611 = vmatprep.subr.mxu0 0.0
        %612 = vmatpush1.msra.mxu0 0.0
        %613 = vmatprep.subr.mxu0 0.0
        %614 = vmatpush1.msra.mxu0 0.0
        %615 = vmatprep.subr.mxu0 0.0
        %616 = vmatpush1.msra.mxu0 0.0
        %617 = vmatprep.subr.mxu0 0.0
        %618 = vmatpush1.msra.mxu0 0.0
        %619 = vmatprep.subr.mxu0 0.0
        %620 = vmatpush1.msra.mxu0 0.0
        %621 = vmatprep.subr.mxu0 0.0
        %622 = vmatpush1.msra.mxu0 0.0
        %623 = vmatprep.subr.mxu0 0.0
        %624 = vmatpush1.msra.mxu0 0.0
        %625 = vmatprep.subr.mxu0 0.0
        %626 = vmatpush1.msra.mxu0 0.0
        %627 = vmatprep.subr.mxu0 0.0
        %628 = vmatpush1.msra.mxu0 0.0
        %629 = vmatprep.subr.mxu0 0.0
        %630 = vmatpush1.msra.mxu0 0.0
        %631 = vmatprep.subr.mxu0 0.0
        %632 = vmatpush1.msra.mxu0 0.0
        %633 = vmatprep.subr.mxu0 0.0
        %634 = vmatpush1.msra.mxu0 0.0
        %635 = vmatprep.subr.mxu0 0.0
        %636 = vmatpush1.msra.mxu0 0.0
        %637 = vmatprep.subr.mxu0 0.0
        %638 = vmatpush1.msra.mxu0 0.0
        %639 = vmatprep.subr.mxu0 0.0
        %640 = vmatpush1.msra.mxu0 0.0
        %641 = vmatprep.subr.mxu0 0.0
        %642 = vmatpush1.msra.mxu0 0.0
        %643 = vmatprep.mubr.f32.mxu0 0.0
        %v644 = vand.u32 %v200, 4294901760
        %v645 = vsub.f32 %v200, %v644
        %v646 = vand.u32 %v645, 4294901760
        %647 = vmatmul.mubr.f32.gmra.mrb[0].mxu0 %v646
        %v648 = vpop.f32.mrb[0].mxu0
        %v649 = vadd.f32 %v560, %v648
        %v650 = vpop.f32.mrb[0].mxu0
        %651 = vdwg.mxu0
        %652 = vmatprep.subr.mxu0 0.0
        %v653 = vand.u32 %v201, 4294901760
        %v654 = vsub.f32 %v201, %v653
        %v655 = vand.u32 %v654, 4294901760
        %656 = vmatpush1.msra.mxu0 %v655
        %657 = vmatprep.subr.mxu0 0.0
        %v658 = vand.u32 %v202, 4294901760
        %v659 = vsub.f32 %v202, %v658
        %v660 = vand.u32 %v659, 4294901760
        %661 = vmatpush1.msra.mxu0 %v660
        %662 = vmatprep.subr.mxu0 0.0
        %v663 = vand.u32 %v203, 4294901760
        %v664 = vsub.f32 %v203, %v663
        %v665 = vand.u32 %v664, 4294901760
        %666 = vmatpush1.msra.mxu0 %v665
        %667 = vmatprep.subr.mxu0 0.0
        %v668 = vand.u32 %v204, 4294901760
        %v669 = vsub.f32 %v204, %v668
        %v670 = vand.u32 %v669, 4294901760
        %671 = vmatpush1.msra.mxu0 %v670
        %672 = vmatprep.subr.mxu0 0.0
        %v673 = vand.u32 %v205, 4294901760
        %v674 = vsub.f32 %v205, %v673
        %v675 = vand.u32 %v674, 4294901760
        %676 = vmatpush1.msra.mxu0 %v675
        %677 = vmatprep.subr.mxu0 0.0
        %v678 = vand.u32 %v206, 4294901760
        %v679 = vsub.f32 %v206, %v678
        %v680 = vand.u32 %v679, 4294901760
        %681 = vmatpush1.msra.mxu0 %v680
        %682 = vmatprep.subr.mxu0 0.0
        %v683 = vand.u32 %v207, 4294901760
        %v684 = vsub.f32 %v207, %v683
        %v685 = vand.u32 %v684, 4294901760
        %686 = vmatpush1.msra.mxu0 %v685
        %687 = vmatprep.subr.mxu0 0.0
        %v688 = vand.u32 %v208, 4294901760
        %v689 = vsub.f32 %v208, %v688
        %v690 = vand.u32 %v689, 4294901760
        %691 = vmatpush1.msra.mxu0 %v690
        %692 = vmatprep.subr.mxu0 0.0
        %v693 = vand.u32 %v209, 4294901760
        %v694 = vsub.f32 %v209, %v693
        %v695 = vand.u32 %v694, 4294901760
        %696 = vmatpush1.msra.mxu0 %v695
        %697 = vmatprep.subr.mxu0 0.0
        %v698 = vand.u32 %v210, 4294901760
        %v699 = vsub.f32 %v210, %v698
        %v700 = vand.u32 %v699, 4294901760
        %701 = vmatpush1.msra.mxu0 %v700
        %702 = vmatprep.subr.mxu0 0.0
        %v703 = vand.u32 %v211, 4294901760
        %v704 = vsub.f32 %v211, %v703
        %v705 = vand.u32 %v704, 4294901760
        %706 = vmatpush1.msra.mxu0 %v705
        %707 = vmatprep.subr.mxu0 0.0
        %v708 = vand.u32 %v212, 4294901760
        %v709 = vsub.f32 %v212, %v708
        %v710 = vand.u32 %v709, 4294901760
        %711 = vmatpush1.msra.mxu0 %v710
        %712 = vmatprep.subr.mxu0 0.0
        %v713 = vand.u32 %v213, 4294901760
        %v714 = vsub.f32 %v213, %v713
        %v715 = vand.u32 %v714, 4294901760
        %716 = vmatpush1.msra.mxu0 %v715
        %717 = vmatprep.subr.mxu0 0.0
        %v718 = vand.u32 %v214, 4294901760
        %v719 = vsub.f32 %v214, %v718
        %v720 = vand.u32 %v719, 4294901760
        %721 = vmatpush1.msra.mxu0 %v720
        %722 = vmatprep.subr.mxu0 0.0
        %v723 = vand.u32 %v215, 4294901760
        %v724 = vsub.f32 %v215, %v723
        %v725 = vand.u32 %v724, 4294901760
        %726 = vmatpush1.msra.mxu0 %v725
        %727 = vmatprep.subr.mxu0 0.0
        %v728 = vand.u32 %v216, 4294901760
        %v729 = vsub.f32 %v216, %v728
        %v730 = vand.u32 %v729, 4294901760
        %731 = vmatpush1.msra.mxu0 %v730
        %732 = vmatprep.subr.mxu0 0.0
        %733 = vmatpush1.msra.mxu0 0.0
        %734 = vmatprep.subr.mxu0 0.0
        %735 = vmatpush1.msra.mxu0 0.0
        %736 = vmatprep.subr.mxu0 0.0
        %737 = vmatpush1.msra.mxu0 0.0
        %738 = vmatprep.subr.mxu0 0.0
        %739 = vmatpush1.msra.mxu0 0.0
        %740 = vmatprep.subr.mxu0 0.0
        %741 = vmatpush1.msra.mxu0 0.0
        %742 = vmatprep.subr.mxu0 0.0
        %743 = vmatpush1.msra.mxu0 0.0
        %744 = vmatprep.subr.mxu0 0.0
        %745 = vmatpush1.msra.mxu0 0.0
        %746 = vmatprep.subr.mxu0 0.0
        %747 = vmatpush1.msra.mxu0 0.0
        %748 = vmatprep.subr.mxu0 0.0
        %749 = vmatpush1.msra.mxu0 0.0
        %750 = vmatprep.subr.mxu0 0.0
        %751 = vmatpush1.msra.mxu0 0.0
        %752 = vmatprep.subr.mxu0 0.0
        %753 = vmatpush1.msra.mxu0 0.0
        %754 = vmatprep.subr.mxu0 0.0
        %755 = vmatpush1.msra.mxu0 0.0
        %756 = vmatprep.subr.mxu0 0.0
        %757 = vmatpush1.msra.mxu0 0.0
        %758 = vmatprep.subr.mxu0 0.0
        %759 = vmatpush1.msra.mxu0 0.0
        %760 = vmatprep.subr.mxu0 0.0
        %761 = vmatpush1.msra.mxu0 0.0
        %762 = vmatprep.subr.mxu0 0.0
        %763 = vmatpush1.msra.mxu0 0.0
        %764 = vmatprep.mubr.f32.mxu0 0.0
        %v765 = vand.u32 %v200, 4294901760
        %766 = vmatmul.mubr.f32.gmra.mrb[0].mxu0 %v765
        %v767 = vpop.f32.mrb[0].mxu0
        %v768 = vadd.f32 %v649, %v767
        %v769 = vpop.f32.mrb[0].mxu0
        %770 = vdwg.mxu0
        %771 = vmatprep.subr.mxu0 0.0
        %v772 = vand.u32 %v201, 4294901760
        %773 = vmatpush1.msra.mxu0 %v772
        %774 = vmatprep.subr.mxu0 0.0
        %v775 = vand.u32 %v202, 4294901760
        %776 = vmatpush1.msra.mxu0 %v775
        %777 = vmatprep.subr.mxu0 0.0
        %v778 = vand.u32 %v203, 4294901760
        %779 = vmatpush1.msra.mxu0 %v778
        %780 = vmatprep.subr.mxu0 0.0
        %v781 = vand.u32 %v204, 4294901760
        %782 = vmatpush1.msra.mxu0 %v781
        %783 = vmatprep.subr.mxu0 0.0
        %v784 = vand.u32 %v205, 4294901760
        %785 = vmatpush1.msra.mxu0 %v784
        %786 = vmatprep.subr.mxu0 0.0
        %v787 = vand.u32 %v206, 4294901760
        %788 = vmatpush1.msra.mxu0 %v787
        %789 = vmatprep.subr.mxu0 0.0
        %v790 = vand.u32 %v207, 4294901760
        %791 = vmatpush1.msra.mxu0 %v790
        %792 = vmatprep.subr.mxu0 0.0
        %v793 = vand.u32 %v208, 4294901760
        %794 = vmatpush1.msra.mxu0 %v793
        %795 = vmatprep.subr.mxu0 0.0
        %v796 = vand.u32 %v209, 4294901760
        %797 = vmatpush1.msra.mxu0 %v796
        %798 = vmatprep.subr.mxu0 0.0
        %v799 = vand.u32 %v210, 4294901760
        %800 = vmatpush1.msra.mxu0 %v799
        %801 = vmatprep.subr.mxu0 0.0
        %v802 = vand.u32 %v211, 4294901760
        %803 = vmatpush1.msra.mxu0 %v802
        %804 = vmatprep.subr.mxu0 0.0
        %v805 = vand.u32 %v212, 4294901760
        %806 = vmatpush1.msra.mxu0 %v805
        %807 = vmatprep.subr.mxu0 0.0
        %v808 = vand.u32 %v213, 4294901760
        %809 = vmatpush1.msra.mxu0 %v808
        %810 = vmatprep.subr.mxu0 0.0
        %v811 = vand.u32 %v214, 4294901760
        %812 = vmatpush1.msra.mxu0 %v811
        %813 = vmatprep.subr.mxu0 0.0
        %v814 = vand.u32 %v215, 4294901760
        %815 = vmatpush1.msra.mxu0 %v814
        %816 = vmatprep.subr.mxu0 0.0
        %v817 = vand.u32 %v216, 4294901760
        %818 = vmatpush1.msra.mxu0 %v817
        %819 = vmatprep.subr.mxu0 0.0
        %820 = vmatpush1.msra.mxu0 0.0
        %821 = vmatprep.subr.mxu0 0.0
        %822 = vmatpush1.msra.mxu0 0.0
        %823 = vmatprep.subr.mxu0 0.0
        %824 = vmatpush1.msra.mxu0 0.0
        %825 = vmatprep.subr.mxu0 0.0
        %826 = vmatpush1.msra.mxu0 0.0
        %827 = vmatprep.subr.mxu0 0.0
        %828 = vmatpush1.msra.mxu0 0.0
        %829 = vmatprep.subr.mxu0 0.0
        %830 = vmatpush1.msra.mxu0 0.0
        %831 = vmatprep.subr.mxu0 0.0
        %832 = vmatpush1.msra.mxu0 0.0
        %833 = vmatprep.subr.mxu0 0.0
        %834 = vmatpush1.msra.mxu0 0.0
        %835 = vmatprep.subr.mxu0 0.0
        %836 = vmatpush1.msra.mxu0 0.0
        %837 = vmatprep.subr.mxu0 0.0
        %838 = vmatpush1.msra.mxu0 0.0
        %839 = vmatprep.subr.mxu0 0.0
        %840 = vmatpush1.msra.mxu0 0.0
        %841 = vmatprep.subr.mxu0 0.0
        %842 = vmatpush1.msra.mxu0 0.0
        %843 = vmatprep.subr.mxu0 0.0
        %844 = vmatpush1.msra.mxu0 0.0
        %845 = vmatprep.subr.mxu0 0.0
        %846 = vmatpush1.msra.mxu0 0.0
        %847 = vmatprep.subr.mxu0 0.0
        %848 = vmatpush1.msra.mxu0 0.0
        %849 = vmatprep.subr.mxu0 0.0
        %850 = vmatpush1.msra.mxu0 0.0
        %851 = vmatprep.mubr.f32.mxu0 0.0
        %v852 = vand.u32 %v200, 4294901760
        %853 = vmatmul.mubr.f32.gmra.mrb[0].mxu0 %v852
        %v854 = vpop.f32.mrb[0].mxu0
        %v855 = vadd.f32 %v768, %v854
        %v856 = vpop.f32.mrb[0].mxu0
        %857 = vdwg.mxu0
        %858 = vst [vmem:[%s180] sm:$0xff] %v855
        %vm859 = vcmp.lt.s32.totalorder %v194, 65
        %v860 = vsel %vm859, 0.0, -1e+30
        %v861 = vadd.f32 %v855, %v860
        %862 = vmax.xlane.f32.xlu0 %v861
        %v863 = vpop.xlane.xlu0 %862
        %v864 = vsub.f32 %v861, %v863
        %v865 = vmul.f32 %v864, 1.442695
        %v866 = vpow.pop %v865
        %867 = vadd.xlane.f32.xlu0 %v866
        %v868 = vpop.xlane.xlu0 %867
        %v869 = vlog2.pop %v868
        %v870 = vmul.f32 %v869, 0.6931472
        %v871 = vadd.f32 %v863, %v870
        %872 = vset.pattern.permute.xlu0 1
        %873 = vperm.xlu0 %872, %v192
        %v874 = vpop.permute.xlu0 %873
        %vm875 = vcmp.eq.s32.totalorder %v194, %v874
        %v876 = vsel %vm875, %v855, 0.0
        %877 = vadd.xlane.f32.xlu0 %v876
        %v878 = vpop.xlane.xlu0 %877
        %s879 = smul.u32 %s22, 8
        %v880 = vlaneseq
        %v881 = vshrl.u32 %v880, 7
        %v882 = vstv %s879
        %v883 = vadd.s32 %v882, %v881
        %vm884 = vcmp.lt.s32.totalorder %v883, 16
        %v885 = vsub.f32 %v871, %v878
        %v886 = vsel %vm884, %v885, 0.0
        %vm887 = vcmask 7168
        %v888 = vsel %vm887, %v886, 0.0
        %889 = vadd.xlane.f32.xlu0 %v888
        %v890 = vpop.xlane.xlu0 %889
        %v891 = vrot.slane %v890, 4
        %v892 = vadd.f32 %v890, %v891
        %v893 = vrot.slane %v892, 2
        %v894 = vadd.f32 %v892, %v893
        %v895 = vrot.slane %v894, 1
        %v896 = vadd.f32 %v894, %v895
        %s897 = vtos %v896
        %v898 = vstv %s897
        %899 = vst [vmem:[%s187] sm:$0xff] %v898
        %s900 = sand.u32 %s77, 1
        %s901 = scalar_lea.sflag [#allocation4], %s900
        %s902 = sand.u32 %s77, 1
        %s903 = smul.addr %s902, 8
        %s904 = scalar_lea.vmem [#allocation5], %s903
        %s905 = sand.u32 %s103, 1
        %s906 = scalar_lea.sflag [#allocation7], %s905
        %s907 = sand.u32 %s103, 1
        %s908 = smul.addr %s907, 8
        %s909 = scalar_lea.vmem [#allocation6], %s908
        // Predicated region
        $region33: #{tpu_custom_call.1} parent=27 // pred_check
          %p910 = pneg %p87
        $region34: #{tpu_custom_call.1} parent=27 // pred_check_branch
          %912 = sbr.rel (%p910) target = $region36
        $region35: #{tpu_custom_call.1} parent=27 // pred_region
          %s914 = ssub.s32 128, 128
          %915 = vsyncadd %s901, %s914
          %s916 = smul.addr %s22, 128
          %s917 = scalar_lea.hbm %s2, %s916
          %s919 = sshll.u32 %s904, 4
          %s920 = int_to_ptr.vmem [resolvable:$true] %s919
          %922 = dma.vmem_to_hbm [thread:$0]  %s920, 128, %s917, %s901
        $region36: #{tpu_custom_call.1} parent=27 // pred_fallthru
          _
        // Predicated region
        $region37: #{tpu_custom_call.1} parent=27 // pred_check
          %p923 = pneg %p113
        $region38: #{tpu_custom_call.1} parent=27 // pred_check_branch
          %925 = sbr.rel (%p923) target = $region40
        $region39: #{tpu_custom_call.1} parent=27 // pred_region
          %s927 = ssub.s32 128, 128
          %928 = vsyncadd %s906, %s927
          %s929 = smul.addr %s22, 128
          %s930 = scalar_lea.hbm %s3, %s929
          %s932 = sshll.u32 %s909, 4
          %s933 = int_to_ptr.vmem [resolvable:$true] %s932
          %935 = dma.vmem_to_hbm [thread:$0]  %s933, 128, %s930, %s906
        $region40: #{tpu_custom_call.1} parent=27 // pred_fallthru
          _
      $region28: #{tpu_custom_call.1} parent=5 // pred_fallthru
        _
      %p936 = scmp.le.s32.totalorder 2, %s17
      // Predicated region
      $region41: #{tpu_custom_call.1} parent=5 // pred_check
        %p937 = pneg %p936
      $region42: #{tpu_custom_call.1} parent=5 // pred_check_branch
        %939 = sbr.rel (%p937) target = $region44
      $region43: #{tpu_custom_call.1} parent=5 // pred_region
        %s940 = ssub.s32 %s17, 2
        // Predicated region
        $region45: #{tpu_custom_call.1} parent=43 // pred_check
          %p941 = pneg %p93
        $region46: #{tpu_custom_call.1} parent=43 // pred_check_branch
          %943 = sbr.rel (%p941) target = $region48
        $region47: #{tpu_custom_call.1} parent=43 // pred_region
          %s944 = sand.u32 %s78, 1
          %s945 = scalar_lea.sflag [#allocation4], %s944
          %s946 = sand.u32 %s78, 1
          %s947 = smul.addr %s946, 8
          %s948 = scalar_lea.vmem [#allocation5], %s947
          %949 = dma.done %s945, 128
        $region48: #{tpu_custom_call.1} parent=43 // pred_fallthru
          _
        // Predicated region
        $region49: #{tpu_custom_call.1} parent=43 // pred_check
          %p950 = pneg %p119
        $region50: #{tpu_custom_call.1} parent=43 // pred_check_branch
          %952 = sbr.rel (%p950) target = $region52
        $region51: #{tpu_custom_call.1} parent=43 // pred_region
          %s953 = sand.u32 %s104, 1
          %s954 = scalar_lea.sflag [#allocation7], %s953
          %s955 = sand.u32 %s104, 1
          %s956 = smul.addr %s955, 8
          %s957 = scalar_lea.vmem [#allocation6], %s956
          %958 = dma.done %s954, 128
        $region52: #{tpu_custom_call.1} parent=43 // pred_fallthru
          _
      $region44: #{tpu_custom_call.1} parent=5 // pred_fallthru
        _
    $region6: #{tpu_custom_call.1} parent=1 // loop_footer
      %s21 = sadd.s32 1, %s17
    $region7: #{tpu_custom_call.1} parent=1 // loop_footer_branch
      %16 = sbr.rel target = $region3
    $region8: #{tpu_custom_call.1} parent=1 // loop_exit
      _
    %959 = vsyncpa [#allocation3], 1
    %s960 = scalar_lea.sflag [#allocation3], 1
    %961 = vsyncpa %s960, 1
    %962 = vsyncpa [#allocation4], 1
    %s963 = scalar_lea.sflag [#allocation4], 1
    %964 = vsyncpa %s963, 1
    %965 = vsyncpa [#allocation7], 1
    %s966 = scalar_lea.sflag [#allocation7], 1
    %967 = vsyncpa %s966, 1

</llo_original>
